<compile_context>
chip_gen: v6e
topology: v6e:2x2x1
jax: 0.10.0
libtpu: 0.0.40
codegen_flags: <defaults>
</compile_context>

<pallas_src>
import jax
import jax.numpy as jnp
from jax.experimental import pallas as pl
from jax.experimental.pallas import tpu as pltpu

IMG_IN = 1000    # resnet output dim (kept unpadded; full-dim block)
TXT_IN = 768     # bert hidden
HID = 128        # fused feature dim
NCLS = 3         # classifier classes
OUT_PAD = 128    # lane-dense padded output width
MAX_TB = 1024    # max batch-tile rows


def bert_resnet_head_kernel(
    img_ref,      # [TB, 1000] bf16  (resnet output)
    txt_ref,      # [TB, 768]  bf16  (bert CLS token)
    w_imgfc_ref,  # [1000,128] bf16  (img_fc weight)
    w_txtfc_ref,  # [768, 128] bf16  (text_fc weight)
    small_ref,    # [8, 128]   f32   packed small params:
                  #   row 0: b_imgfc, row 1: b_txtfc,
                  #   row 2: imgW weight row, row 3: textW weight row,
                  #   row 4: b_cls (padded to 128), row 5 lanes 0/1: b_imgw/b_txtw
    w_cls_ref,    # [128, 128] bf16  classifier weight, padded to 128 out lanes
    out_ref,      # [TB, 128]  bf16  padded logits (first 3 lanes valid)
):
    small = small_ref[...]                      # single [8,128] load

    # img_feature = img_fc(resnet(imgs)); text_feature = text_fc(bert_cls)
    # bf16 x bf16 on the MXU with f32 accumulation.
    img_feat = (
        jnp.dot(img_ref[...], w_imgfc_ref[...], preferred_element_type=jnp.float32)
        + small[0:1, :]
    )                                           # [TB, 128] f32
    txt_feat = (
        jnp.dot(txt_ref[...], w_txtfc_ref[...], preferred_element_type=jnp.float32)
        + small[1:2, :]
    )                                           # [TB, 128] f32

    # weight(): scalar gates per example on VPU (broadcast mul) + XLU
    # (lane reduce) instead of 1-lane MXU matmuls.  Elementwise math stays
    # f32 (v5e VPU has no bf16 path).
    img_w = jnp.sum(img_feat * small[2:3, :], axis=-1, keepdims=True) + small[5:6, 0:1]
    txt_w = jnp.sum(txt_feat * small[3:4, :], axis=-1, keepdims=True) + small[5:6, 1:2]

    # Weighted fusion.
    feature = img_w * img_feat + txt_w * txt_feat          # [TB, 128] f32

    # Classifier: bf16 x bf16 single MXU pass, f32 accumulation; output lanes
    # padded to 128 for unmasked lane-dense stores, written back as bf16.
    logits = (
        jnp.dot(feature.astype(jnp.bfloat16), w_cls_ref[...],
                preferred_element_type=jnp.float32)
        + small[4:5, :]
    )                                                      # [TB, 128] f32
    out_ref[...] = logits.astype(out_ref.dtype)


def _round_up(x, m):
    return (x + m - 1) // m * m


def pack_params(p):
    """Pack nn.Linear-shaped params into kernel-friendly buffers."""
    small = jnp.zeros((8, HID), jnp.float32)
    small = small.at[0, :].set(p["b_imgfc"][0])
    small = small.at[1, :].set(p["b_txtfc"][0])
    small = small.at[2, :].set(p["w_imgw"][:, 0])
    small = small.at[3, :].set(p["w_txtw"][:, 0])
    small = small.at[4, :NCLS].set(p["b_cls"][0])
    small = small.at[5, 0].set(p["b_imgw"][0, 0])
    small = small.at[5, 1].set(p["b_txtw"][0, 0])
    w_cls = jnp.zeros((HID, OUT_PAD), jnp.float32).at[:, :NCLS].set(p["w_cls"])
    return dict(
        w_imgfc=p["w_imgfc"].astype(jnp.bfloat16),   # [1000, 128]
        w_txtfc=p["w_txtfc"].astype(jnp.bfloat16),   # [768, 128]
        small=small,                                 # [8, 128] f32
        w_cls=w_cls.astype(jnp.bfloat16),            # [128, 128]
    )


def _choose_tb(B):
    """Batch-tile rows: full-array tile for tiny B; otherwise >= 2 grid steps,
    a multiple of 16 sublanes (bf16 output packing), capped at MAX_TB."""
    if B <= 16:
        return B
    return min(MAX_TB, _round_up(pl.cdiv(B, 2), 16))


def bert_resnet_head(img_backbone, text_cls, packed):
    B = img_backbone.shape[0]
    # bf16 cast only if the producer did not already emit bf16 (no pad copy,
    # no B_pad copy: ragged last tile is masked by the grid machinery).
    img = img_backbone if img_backbone.dtype == jnp.bfloat16 else img_backbone.astype(jnp.bfloat16)
    txt = text_cls if text_cls.dtype == jnp.bfloat16 else text_cls.astype(jnp.bfloat16)

    TB = _choose_tb(B)
    grid = (pl.cdiv(B, TB),)

    flops = 2 * B * HID * (IMG_IN + TXT_IN + OUT_PAD) + 8 * B * HID
    bytes_accessed = (
        (IMG_IN + TXT_IN + OUT_PAD) * HID * 2    # bf16 weights
        + 8 * HID * 4                            # packed small params (f32)
        + B * (IMG_IN + TXT_IN) * 2              # bf16 activations
        + B * OUT_PAD * 2                        # bf16 padded logits
    )

    out_padded = pl.pallas_call(
        bert_resnet_head_kernel,
        out_shape=jax.ShapeDtypeStruct((B, OUT_PAD), jnp.bfloat16),
        grid=grid,
        in_specs=[
            pl.BlockSpec((TB, IMG_IN), lambda i: (i, 0)),
            pl.BlockSpec((TB, TXT_IN), lambda i: (i, 0)),
            # Weights: same block every grid step -> stay VMEM-resident.
            pl.BlockSpec((IMG_IN, HID), lambda i: (0, 0)),
            pl.BlockSpec((TXT_IN, HID), lambda i: (0, 0)),
            pl.BlockSpec((8, HID), lambda i: (0, 0)),
            pl.BlockSpec((HID, OUT_PAD), lambda i: (0, 0)),
        ],
        out_specs=pl.BlockSpec((TB, OUT_PAD), lambda i: (i, 0)),
        compiler_params=pltpu.CompilerParams(
            dimension_semantics=("parallel",),
            vmem_limit_bytes=32 * 1024 * 1024),
        cost_estimate=pl.CostEstimate(
            flops=flops, transcendentals=0, bytes_accessed=bytes_accessed),
    )(img, txt, packed["w_imgfc"], packed["w_txtfc"],
      packed["small"], packed["w_cls"])

    return out_padded[:, :NCLS]


def init_params(key):
    """Deterministic parameter init matching the nn.Linear shapes.

    PyTorch stores Linear weight as [out, in]; we store the transpose
    [in, out] so the kernel computes x @ W + b directly.
    """
    ks = jax.random.split(key, 10)

    def linear(kw, kb, in_dim, out_dim):
        bound = 1.0 / (in_dim ** 0.5)
        w = jax.random.uniform(kw, (in_dim, out_dim), jnp.float32, -bound, bound)
        b = jax.random.uniform(kb, (1, out_dim), jnp.float32, -bound, bound)
        return w, b

    w_imgfc, b_imgfc = linear(ks[0], ks[1], IMG_IN, HID)   # img_fc
    w_txtfc, b_txtfc = linear(ks[2], ks[3], TXT_IN, HID)   # text_fc
    w_imgw, b_imgw = linear(ks[4], ks[5], HID, 1)          # imgW
    w_txtw, b_txtw = linear(ks[6], ks[7], HID, 1)          # textW
    w_cls, b_cls = linear(ks[8], ks[9], HID, NCLS)         # classifier
    return dict(
        w_imgfc=w_imgfc, b_imgfc=b_imgfc,
        w_txtfc=w_txtfc, b_txtfc=b_txtfc,
        w_imgw=w_imgw, b_imgw=b_imgw,
        w_txtw=w_txtw, b_txtw=b_txtw,
        w_cls=w_cls, b_cls=b_cls,
    )


def reference_bf16(img_backbone, text_cls, packed):
    """Reference using the same bf16-quantized weights/inputs as the kernel."""
    img = img_backbone.astype(jnp.bfloat16).astype(jnp.float32)
    txt = text_cls.astype(jnp.bfloat16).astype(jnp.float32)
    w_imgfc = packed["w_imgfc"].astype(jnp.float32)
    w_txtfc = packed["w_txtfc"].astype(jnp.float32)
    small = packed["small"]
    img_f = img @ w_imgfc + small[0:1, :]
    txt_f = txt @ w_txtfc + small[1:2, :]
    iw = jnp.sum(img_f * small[2:3, :], axis=-1, keepdims=True) + small[5, 0]
    tw = jnp.sum(txt_f * small[3:4, :], axis=-1, keepdims=True) + small[5, 1]
    feat = (iw * img_f + tw * txt_f).astype(jnp.bfloat16).astype(jnp.float32)
    w_cls = packed["w_cls"].astype(jnp.float32)
    return (feat @ w_cls + small[4:5, :])[:, :NCLS]


def reference_f32(img_backbone, text_cls, p):
    """Original full-f32 module semantics (no quantization)."""
    img_f = img_backbone @ p["w_imgfc"] + p["b_imgfc"]
    txt_f = text_cls @ p["w_txtfc"] + p["b_txtfc"]
    iw = img_f @ p["w_imgw"] + p["b_imgw"]
    tw = txt_f @ p["w_txtw"] + p["b_txtw"]
    feat = iw * img_f + tw * txt_f
    return feat @ p["w_cls"] + p["b_cls"]


if __name__ == "__main__":
    key = jax.random.PRNGKey(0)
    k_params, k_img, k_txt = jax.random.split(key, 3)

    B = 2          # batch
    SEQ = 8        # (text_ids would be [B, SEQ]; bert itself is not emulated)

    params = init_params(k_params)
    packed = pack_params(params)

    # Backbone outputs (stand-ins for resnet(imgs) and bert(...)[:, 0, :]).
    img_backbone = jax.random.normal(k_img, (B, IMG_IN), jnp.float32)
    text_cls = jax.random.normal(k_txt, (B, TXT_IN), jnp.float32)

    # bf16 cast folded into the "producer" (per perf review) — no extra
    # host-side pad/copy passes before the kernel.
    out = bert_resnet_head(img_backbone.astype(jnp.bfloat16),
                           text_cls.astype(jnp.bfloat16), packed)
    out = jax.block_until_ready(out)
    out_f32 = out.astype(jnp.float32)

    ref_q = reference_bf16(img_backbone, text_cls, packed)
    ref_f = reference_f32(img_backbone, text_cls, params)

    assert out.shape == (B, NCLS), out.shape
    # Matches the bf16-quantized math closely ...
    assert jnp.allclose(out_f32, ref_q, atol=5e-2, rtol=5e-2), (out_f32, ref_q)
    # ... and the original f32 module semantics within bf16-level tolerance.
    assert jnp.allclose(out_f32, ref_f, atol=2e-1, rtol=2e-1), (out_f32, ref_f)

    print("KERNEL_OK")
</pallas_src>

<mosaic_0001>
module attributes {stable_mosaic.version = 11 : i64} {
  func.func @bert_resnet_head_kernel(%arg0: i32, %arg1: memref<2x1000xbf16, #tpu.memory_space<vmem>>, %arg2: memref<2x768xbf16, #tpu.memory_space<vmem>>, %arg3: memref<1000x128xbf16, #tpu.memory_space<vmem>>, %arg4: memref<768x128xbf16, #tpu.memory_space<vmem>>, %arg5: memref<8x128xf32, #tpu.memory_space<vmem>>, %arg6: memref<128x128xbf16, #tpu.memory_space<vmem>>, %arg7: memref<2x128xbf16, #tpu.memory_space<vmem>>) attributes {dimension_semantics = [#tpu.dimension_semantics<parallel>], iteration_bounds = array<i64: 1>, scalar_prefetch = 0 : i64, scratch_operands = 0 : i64, tpu.core_type = #tpu.core_type<tc>, window_params = [{transform_indices = @transform_0, window_bounds = array<i64: 2, 1000>}, {transform_indices = @transform_1, window_bounds = array<i64: 2, 768>}, {pipeline_mode = #tpu.pipeline_mode<synchronous>, transform_indices = @transform_2, window_bounds = array<i64: 1000, 128>}, {pipeline_mode = #tpu.pipeline_mode<synchronous>, transform_indices = @transform_3, window_bounds = array<i64: 768, 128>}, {pipeline_mode = #tpu.pipeline_mode<synchronous>, transform_indices = @transform_4, window_bounds = array<i64: 8, 128>}, {pipeline_mode = #tpu.pipeline_mode<synchronous>, transform_indices = @transform_5, window_bounds = array<i64: 128, 128>}, {transform_indices = @transform_6, window_bounds = array<i64: 2, 128>}]} {
    %c0 = arith.constant 0 : index
    %c0_0 = arith.constant 0 : index
    %0 = vector.load %arg5[%c0, %c0_0] : memref<8x128xf32, #tpu.memory_space<vmem>>, vector<8x128xf32>
    %c0_1 = arith.constant 0 : index
    %c0_2 = arith.constant 0 : index
    %1 = vector.load %arg1[%c0_1, %c0_2] : memref<2x1000xbf16, #tpu.memory_space<vmem>>, vector<2x1000xbf16>
    %c0_3 = arith.constant 0 : index
    %c0_4 = arith.constant 0 : index
    %2 = vector.load %arg3[%c0_3, %c0_4] : memref<1000x128xbf16, #tpu.memory_space<vmem>>, vector<1000x128xbf16>
    %cst = arith.constant dense<0.000000e+00> : vector<2x128xf32>
    %3 = tpu.matmul %1, %2, %cst {dimension_numbers = #tpu.dot_dimension_numbers<[1], [0], [0], [1], [0, 0, 1, 1], [], []>} : vector<2x1000xbf16>, vector<1000x128xbf16>, vector<2x128xf32> -> vector<2x128xf32>
    %4 = vector.extract_strided_slice %0 {offsets = [0, 0], sizes = [1, 128], strides = [1, 1]} : vector<8x128xf32> to vector<1x128xf32>
    %5 = vector.broadcast %4 : vector<1x128xf32> to vector<2x128xf32>
    %6 = arith.addf %3, %5 : vector<2x128xf32>
    %c0_5 = arith.constant 0 : index
    %c0_6 = arith.constant 0 : index
    %7 = vector.load %arg2[%c0_5, %c0_6] : memref<2x768xbf16, #tpu.memory_space<vmem>>, vector<2x768xbf16>
    %c0_7 = arith.constant 0 : index
    %c0_8 = arith.constant 0 : index
    %8 = vector.load %arg4[%c0_7, %c0_8] : memref<768x128xbf16, #tpu.memory_space<vmem>>, vector<768x128xbf16>
    %cst_9 = arith.constant dense<0.000000e+00> : vector<2x128xf32>
    %9 = tpu.matmul %7, %8, %cst_9 {dimension_numbers = #tpu.dot_dimension_numbers<[1], [0], [0], [1], [0, 0, 1, 1], [], []>} : vector<2x768xbf16>, vector<768x128xbf16>, vector<2x128xf32> -> vector<2x128xf32>
    %10 = vector.extract_strided_slice %0 {offsets = [1, 0], sizes = [1, 128], strides = [1, 1]} : vector<8x128xf32> to vector<1x128xf32>
    %11 = vector.broadcast %10 : vector<1x128xf32> to vector<2x128xf32>
    %12 = arith.addf %9, %11 : vector<2x128xf32>
    %13 = vector.extract_strided_slice %0 {offsets = [2, 0], sizes = [1, 128], strides = [1, 1]} : vector<8x128xf32> to vector<1x128xf32>
    %14 = vector.broadcast %13 : vector<1x128xf32> to vector<2x128xf32>
    %15 = arith.mulf %6, %14 : vector<2x128xf32>
    %cst_10 = arith.constant dense<0.000000e+00> : vector<2xf32>
    %16 = vector.multi_reduction <add>, %15, %cst_10 [1] : vector<2x128xf32> to vector<2xf32>
    %17 = vector.shape_cast %16 : vector<2xf32> to vector<2x1xf32>
    %18 = vector.extract_strided_slice %0 {offsets = [5, 0], sizes = [1, 1], strides = [1, 1]} : vector<8x128xf32> to vector<1x1xf32>
    %19 = vector.broadcast %18 : vector<1x1xf32> to vector<2x1xf32>
    %20 = arith.addf %17, %19 : vector<2x1xf32>
    %21 = vector.extract_strided_slice %0 {offsets = [3, 0], sizes = [1, 128], strides = [1, 1]} : vector<8x128xf32> to vector<1x128xf32>
    %22 = vector.broadcast %21 : vector<1x128xf32> to vector<2x128xf32>
    %23 = arith.mulf %12, %22 : vector<2x128xf32>
    %cst_11 = arith.constant dense<0.000000e+00> : vector<2xf32>
    %24 = vector.multi_reduction <add>, %23, %cst_11 [1] : vector<2x128xf32> to vector<2xf32>
    %25 = vector.shape_cast %24 : vector<2xf32> to vector<2x1xf32>
    %26 = vector.extract_strided_slice %0 {offsets = [5, 1], sizes = [1, 1], strides = [1, 1]} : vector<8x128xf32> to vector<1x1xf32>
    %27 = vector.broadcast %26 : vector<1x1xf32> to vector<2x1xf32>
    %28 = arith.addf %25, %27 : vector<2x1xf32>
    %29 = vector.broadcast %20 : vector<2x1xf32> to vector<2x128xf32>
    %30 = arith.mulf %29, %6 : vector<2x128xf32>
    %31 = vector.broadcast %28 : vector<2x1xf32> to vector<2x128xf32>
    %32 = arith.mulf %31, %12 : vector<2x128xf32>
    %33 = arith.addf %30, %32 : vector<2x128xf32>
    %34 = arith.truncf %33 : vector<2x128xf32> to vector<2x128xbf16>
    %c0_12 = arith.constant 0 : index
    %c0_13 = arith.constant 0 : index
    %35 = vector.load %arg6[%c0_12, %c0_13] : memref<128x128xbf16, #tpu.memory_space<vmem>>, vector<128x128xbf16>
    %cst_14 = arith.constant dense<0.000000e+00> : vector<2x128xf32>
    %36 = tpu.matmul %34, %35, %cst_14 {dimension_numbers = #tpu.dot_dimension_numbers<[1], [0], [0], [1], [0, 0, 1, 1], [], []>} : vector<2x128xbf16>, vector<128x128xbf16>, vector<2x128xf32> -> vector<2x128xf32>
    %37 = vector.extract_strided_slice %0 {offsets = [4, 0], sizes = [1, 128], strides = [1, 1]} : vector<8x128xf32> to vector<1x128xf32>
    %38 = vector.broadcast %37 : vector<1x128xf32> to vector<2x128xf32>
    %39 = arith.addf %36, %38 : vector<2x128xf32>
    %40 = arith.truncf %39 : vector<2x128xf32> to vector<2x128xbf16>
    %c0_15 = arith.constant 0 : index
    %c0_16 = arith.constant 0 : index
    %41 = vector.load %arg7[%c0_15, %c0_16] : memref<2x128xbf16, #tpu.memory_space<vmem>>, vector<2x128xbf16>
    tpu.vector_store %arg7[%c0_15, %c0_16], %40 {strides = array<i32>} : memref<2x128xbf16, #tpu.memory_space<vmem>>, vector<2x128xbf16>,
    return
  }
  func.func @transform_0(%arg0: i32) -> (i32, i32) {
    %c0_i32 = arith.constant 0 : i32
    %c0_i32_0 = arith.constant 0 : i32
    return %arg0, %c0_i32 : i32, i32
  }
  func.func @transform_1(%arg0: i32) -> (i32, i32) {
    %c0_i32 = arith.constant 0 : i32
    %c0_i32_0 = arith.constant 0 : i32
    return %arg0, %c0_i32 : i32, i32
  }
  func.func @transform_2(%arg0: i32) -> (i32, i32) {
    %c0_i32 = arith.constant 0 : i32
    %c0_i32_0 = arith.constant 0 : i32
    %c0_i32_1 = arith.constant 0 : i32
    return %c0_i32, %c0_i32_0 : i32, i32
  }
  func.func @transform_3(%arg0: i32) -> (i32, i32) {
    %c0_i32 = arith.constant 0 : i32
    %c0_i32_0 = arith.constant 0 : i32
    %c0_i32_1 = arith.constant 0 : i32
    return %c0_i32, %c0_i32_0 : i32, i32
  }
  func.func @transform_4(%arg0: i32) -> (i32, i32) {
    %c0_i32 = arith.constant 0 : i32
    %c0_i32_0 = arith.constant 0 : i32
    %c0_i32_1 = arith.constant 0 : i32
    return %c0_i32, %c0_i32_0 : i32, i32
  }
  func.func @transform_5(%arg0: i32) -> (i32, i32) {
    %c0_i32 = arith.constant 0 : i32
    %c0_i32_0 = arith.constant 0 : i32
    %c0_i32_1 = arith.constant 0 : i32
    return %c0_i32, %c0_i32_0 : i32, i32
  }
  func.func @transform_6(%arg0: i32) -> (i32, i32) {
    %c0_i32 = arith.constant 0 : i32
    %c0_i32_0 = arith.constant 0 : i32
    return %arg0, %c0_i32 : i32, i32
  }
}

</mosaic_0001>

<llo_original>
// kernel: tpu_custom_call.1
$region0: #{tpu_custom_call.1}
  #allocation0 [shape = 'u32[]', space=smem, size = 0x4, offset = 0x4, fixed_abs, tag = 'smem constant byte address 0x4 - core index']
  #allocation1 [shape = 'u32[144,128]{1,0:T(1,128)}', space=vmem, size = 0x12000, scoped, tag = 'internal scratch']
  %s0 = inlined_call_operand.hbm [shape: bf16[2,1000], index: 0, kind: input, shape index: {}]
  %s1 = inlined_call_operand.hbm [shape: bf16[2,768], index: 1, kind: input, shape index: {}]
  %s2 = inlined_call_operand.hbm [shape: bf16[1000,128], index: 2, kind: input, shape index: {}]
  %s3 = inlined_call_operand.hbm [shape: bf16[768,128], index: 3, kind: input, shape index: {}]
  %s4 = inlined_call_operand.hbm [shape: f32[8,128], index: 4, kind: input, shape index: {}]
  %s5 = inlined_call_operand.hbm [shape: bf16[128,128], index: 5, kind: input, shape index: {}]
  %s6 = inlined_call_operand.hbm [shape: bf16[2,128], index: 6, kind: output, shape index: {}]
  %s7 = sld [smem:[#allocation0]]
  $region58: #{tpu_custom_call.1} parent=0
    _
  %s9 = ssub.s32 1, %s7
  %s10 = scalar_select 0, %s9, %s7
  $region1: #{tpu_custom_call.1} parent=0
    #allocation2 [shape = 'u8[4096]{0}', space=vmem, size = 0x1000, scoped, tag = 'input window, operand 0, single buffered']
    #allocation3 [shape = 's32[1]{0}', space=sflag, size = 0x4, scoped, tag = 'scoped memory for tpu_custom_call.1']
    #allocation4 [shape = 's32[1]{0}', space=sflag, size = 0x4, scoped, tag = 'scoped memory for tpu_custom_call.1']
    #allocation5 [shape = 'u8[3072]{0}', space=vmem, size = 0xc00, scoped, tag = 'input window, operand 1, single buffered']
    #allocation6 [shape = 's32[1]{0}', space=sflag, size = 0x4, scoped, tag = 'scoped memory for tpu_custom_call.1']
    #allocation7 [shape = 'u8[256000]{0}', space=vmem, size = 0x3e800, scoped, tag = 'input window, operand 2, single buffered']
    #allocation8 [shape = 'u8[196608]{0}', space=vmem, size = 0x30000, scoped, tag = 'input window, operand 3, single buffered']
    #allocation9 [shape = 's32[1]{0}', space=sflag, size = 0x4, scoped, tag = 'scoped memory for tpu_custom_call.1']
    #allocation10 [shape = 'u8[4096]{0}', space=vmem, size = 0x1000, scoped, tag = 'input window, operand 4, single buffered']
    #allocation11 [shape = 'u8[32768]{0}', space=vmem, size = 0x8000, scoped, tag = 'input window, operand 5, single buffered']
    #allocation12 [shape = 's32[1]{0}', space=sflag, size = 0x4, scoped, tag = 'scoped memory for tpu_custom_call.1']
    #allocation13 [shape = 'u8[512]{0}', space=vmem, size = 0x400, scoped, tag = 'output window, operand 0, single buffered']
    %11 = vsyncpa [#allocation3], 0
    %12 = vsyncpa [#allocation6], 0
    %13 = vsyncpa [#allocation9], 0
    %14 = vsyncpa [#allocation12], 0
    %15 = vsyncpa [#allocation4], 0
    // Predicated region
    $region2: #{tpu_custom_call.1} parent=1 // pred_check
      _
    $region3: #{tpu_custom_call.1} parent=1 // pred_check_branch
      %17 = sbr.rel (0) target = $region5
    $region4: #{tpu_custom_call.1} parent=1 // pred_region
      %s19 = ssub.s32 128, 128
      %20 = vsyncadd [#allocation3], %s19
      %s22 = sshll.u32 [#allocation2], 4
      %s23 = int_to_ptr.vmem [resolvable:$true] %s22
      %25 = dma.hbm_to_vmem [thread:$0]  %s0, 128, %s23, [#allocation3]
    $region5: #{tpu_custom_call.1} parent=1 // pred_fallthru
      _
    // Predicated region
    $region6: #{tpu_custom_call.1} parent=1 // pred_check
      _
    $region7: #{tpu_custom_call.1} parent=1 // pred_check_branch
      %27 = sbr.rel (0) target = $region9
    $region8: #{tpu_custom_call.1} parent=1 // pred_region
      %s29 = ssub.s32 96, 96
      %30 = vsyncadd [#allocation6], %s29
      %s32 = sshll.u32 [#allocation5], 4
      %s33 = int_to_ptr.vmem [resolvable:$true] %s32
      %35 = dma.hbm_to_vmem [thread:$0]  %s1, 96, %s33, [#allocation6]
    $region9: #{tpu_custom_call.1} parent=1 // pred_fallthru
      _
    // Predicated region
    $region10: #{tpu_custom_call.1} parent=1 // pred_check
      _
    $region11: #{tpu_custom_call.1} parent=1 // pred_check_branch
      %37 = sbr.rel (0) target = $region13
    $region12: #{tpu_custom_call.1} parent=1 // pred_region
      %s39 = ssub.s32 8000, 8000
      %40 = vsyncadd [#allocation6], %s39
      %s41 = sshll.u32 [#allocation7], 4
      %s42 = int_to_ptr.vmem [resolvable:$true] %s41
      %47 = dma.hbm_to_vmem [thread:$0]  %s2, 8000, %s42, [#allocation6], 64, 64, 4
    $region13: #{tpu_custom_call.1} parent=1 // pred_fallthru
      _
    // Predicated region
    $region14: #{tpu_custom_call.1} parent=1 // pred_check
      _
    $region15: #{tpu_custom_call.1} parent=1 // pred_check_branch
      %49 = sbr.rel (0) target = $region17
    $region16: #{tpu_custom_call.1} parent=1 // pred_region
      %s51 = ssub.s32 6144, 6144
      %52 = vsyncadd [#allocation9], %s51
      %s53 = sshll.u32 [#allocation8], 4
      %s54 = int_to_ptr.vmem [resolvable:$true] %s53
      %59 = dma.hbm_to_vmem [thread:$0]  %s3, 6144, %s54, [#allocation9], 64, 64, 4
    $region17: #{tpu_custom_call.1} parent=1 // pred_fallthru
      _
    // Predicated region
    $region18: #{tpu_custom_call.1} parent=1 // pred_check
      _
    $region19: #{tpu_custom_call.1} parent=1 // pred_check_branch
      %61 = sbr.rel (0) target = $region21
    $region20: #{tpu_custom_call.1} parent=1 // pred_region
      %s63 = ssub.s32 128, 128
      %64 = vsyncadd [#allocation9], %s63
      %s66 = sshll.u32 [#allocation10], 4
      %s67 = int_to_ptr.vmem [resolvable:$true] %s66
      %69 = dma.hbm_to_vmem [thread:$0]  %s4, 128, %s67, [#allocation9]
    $region21: #{tpu_custom_call.1} parent=1 // pred_fallthru
      _
    // Predicated region
    $region22: #{tpu_custom_call.1} parent=1 // pred_check
      _
    $region23: #{tpu_custom_call.1} parent=1 // pred_check_branch
      %71 = sbr.rel (0) target = $region25
    $region24: #{tpu_custom_call.1} parent=1 // pred_region
      %s73 = ssub.s32 1024, 1024
      %74 = vsyncadd [#allocation12], %s73
      %s75 = sshll.u32 [#allocation11], 4
      %s76 = int_to_ptr.vmem [resolvable:$true] %s75
      %81 = dma.hbm_to_vmem [thread:$0]  %s5, 1024, %s76, [#allocation12], 64, 64, 4
    $region25: #{tpu_custom_call.1} parent=1 // pred_fallthru
      _
    // Predicated region
    $region26: #{tpu_custom_call.1} parent=1 // pred_check
      _
    $region27: #{tpu_custom_call.1} parent=1 // pred_check_branch
      %83 = sbr.rel (0) target = $region29
    $region28: #{tpu_custom_call.1} parent=1 // pred_region
      %84 = dma.done [#allocation3], 128
    $region29: #{tpu_custom_call.1} parent=1 // pred_fallthru
      _
    // Predicated region
    $region30: #{tpu_custom_call.1} parent=1 // pred_check
      _
    $region31: #{tpu_custom_call.1} parent=1 // pred_check_branch
      %86 = sbr.rel (0) target = $region33
    $region32: #{tpu_custom_call.1} parent=1 // pred_region
      %87 = dma.done [#allocation6], 96
    $region33: #{tpu_custom_call.1} parent=1 // pred_fallthru
      _
    // Predicated region
    $region34: #{tpu_custom_call.1} parent=1 // pred_check
      _
    $region35: #{tpu_custom_call.1} parent=1 // pred_check_branch
      %89 = sbr.rel (0) target = $region37
    $region36: #{tpu_custom_call.1} parent=1 // pred_region
      %90 = dma.done [#allocation6], 8000
    $region37: #{tpu_custom_call.1} parent=1 // pred_fallthru
      _
    // Predicated region
    $region38: #{tpu_custom_call.1} parent=1 // pred_check
      _
    $region39: #{tpu_custom_call.1} parent=1 // pred_check_branch
      %92 = sbr.rel (0) target = $region41
    $region40: #{tpu_custom_call.1} parent=1 // pred_region
      %93 = dma.done [#allocation9], 6144
    $region41: #{tpu_custom_call.1} parent=1 // pred_fallthru
      _
    // Predicated region
    $region42: #{tpu_custom_call.1} parent=1 // pred_check
      _
    $region43: #{tpu_custom_call.1} parent=1 // pred_check_branch
      %95 = sbr.rel (0) target = $region45
    $region44: #{tpu_custom_call.1} parent=1 // pred_region
      %96 = dma.done [#allocation9], 128
    $region45: #{tpu_custom_call.1} parent=1 // pred_fallthru
      _
    // Predicated region
    $region46: #{tpu_custom_call.1} parent=1 // pred_check
      _
    $region47: #{tpu_custom_call.1} parent=1 // pred_check_branch
      %98 = sbr.rel (0) target = $region49
    $region48: #{tpu_custom_call.1} parent=1 // pred_region
      %99 = dma.done [#allocation12], 1024
    $region49: #{tpu_custom_call.1} parent=1 // pred_fallthru
      _
    %v101 = vld [vmem:[#allocation10] sm:$0xff]
    %v102 = vld [vmem:[#allocation2] sm:$0xff]
    %v103 = vld [vmem:[#allocation7] sm:$0xf]
    %v104 = vld [vmem:[#allocation7 + $0x4] sm:$0xf]
    %v105 = vld [vmem:[#allocation7 + $0x8] sm:$0xf]
    %v106 = vld [vmem:[#allocation7 + $0xc] sm:$0xf]
    %v107 = vld [vmem:[#allocation7 + $0x10] sm:$0xf]
    %v108 = vld [vmem:[#allocation7 + $0x14] sm:$0xf]
    %v109 = vld [vmem:[#allocation7 + $0x18] sm:$0xf]
    %v110 = vld [vmem:[#allocation7 + $0x1c] sm:$0xf]
    %v111 = vld [vmem:[#allocation7 + $0x20] sm:$0xf]
    %v112 = vld [vmem:[#allocation7 + $0x24] sm:$0xf]
    %v113 = vld [vmem:[#allocation7 + $0x28] sm:$0xf]
    %v114 = vld [vmem:[#allocation7 + $0x2c] sm:$0xf]
    %v115 = vld [vmem:[#allocation7 + $0x30] sm:$0xf]
    %v116 = vld [vmem:[#allocation7 + $0x34] sm:$0xf]
    %v117 = vld [vmem:[#allocation7 + $0x38] sm:$0xf]
    %v118 = vld [vmem:[#allocation7 + $0x3c] sm:$0xf]
    %v119 = vld [vmem:[#allocation7 + $0x40] sm:$0xf]
    %v120 = vld [vmem:[#allocation7 + $0x44] sm:$0xf]
    %v121 = vld [vmem:[#allocation7 + $0x48] sm:$0xf]
    %v122 = vld [vmem:[#allocation7 + $0x4c] sm:$0xf]
    %v123 = vld [vmem:[#allocation7 + $0x50] sm:$0xf]
    %v124 = vld [vmem:[#allocation7 + $0x54] sm:$0xf]
    %v125 = vld [vmem:[#allocation7 + $0x58] sm:$0xf]
    %v126 = vld [vmem:[#allocation7 + $0x5c] sm:$0xf]
    %v127 = vld [vmem:[#allocation7 + $0x60] sm:$0xf]
    %v128 = vld [vmem:[#allocation7 + $0x64] sm:$0xf]
    %v129 = vld [vmem:[#allocation7 + $0x68] sm:$0xf]
    %v130 = vld [vmem:[#allocation7 + $0x6c] sm:$0xf]
    %v131 = vld [vmem:[#allocation7 + $0x70] sm:$0xf]
    %v132 = vld [vmem:[#allocation7 + $0x74] sm:$0xf]
    %v133 = vld [vmem:[#allocation7 + $0x78] sm:$0xf]
    %v134 = vld [vmem:[#allocation7 + $0x7c] sm:$0xf]
    %v135 = vld [vmem:[#allocation7 + $0x80] sm:$0xf]
    %v136 = vld [vmem:[#allocation7 + $0x84] sm:$0xf]
    %v137 = vld [vmem:[#allocation7 + $0x88] sm:$0xf]
    %v138 = vld [vmem:[#allocation7 + $0x8c] sm:$0xf]
    %v139 = vld [vmem:[#allocation7 + $0x90] sm:$0xf]
    %v140 = vld [vmem:[#allocation7 + $0x94] sm:$0xf]
    %v141 = vld [vmem:[#allocation7 + $0x98] sm:$0xf]
    %v142 = vld [vmem:[#allocation7 + $0x9c] sm:$0xf]
    %v143 = vld [vmem:[#allocation7 + $0xa0] sm:$0xf]
    %v144 = vld [vmem:[#allocation7 + $0xa4] sm:$0xf]
    %v145 = vld [vmem:[#allocation7 + $0xa8] sm:$0xf]
    %v146 = vld [vmem:[#allocation7 + $0xac] sm:$0xf]
    %v147 = vld [vmem:[#allocation7 + $0xb0] sm:$0xf]
    %v148 = vld [vmem:[#allocation7 + $0xb4] sm:$0xf]
    %v149 = vld [vmem:[#allocation7 + $0xb8] sm:$0xf]
    %v150 = vld [vmem:[#allocation7 + $0xbc] sm:$0xf]
    %v151 = vld [vmem:[#allocation7 + $0xc0] sm:$0xf]
    %v152 = vld [vmem:[#allocation7 + $0xc4] sm:$0xf]
    %v153 = vld [vmem:[#allocation7 + $0xc8] sm:$0xf]
    %v154 = vld [vmem:[#allocation7 + $0xcc] sm:$0xf]
    %v155 = vld [vmem:[#allocation7 + $0xd0] sm:$0xf]
    %v156 = vld [vmem:[#allocation7 + $0xd4] sm:$0xf]
    %v157 = vld [vmem:[#allocation7 + $0xd8] sm:$0xf]
    %v158 = vld [vmem:[#allocation7 + $0xdc] sm:$0xf]
    %v159 = vld [vmem:[#allocation7 + $0xe0] sm:$0xf]
    %v160 = vld [vmem:[#allocation7 + $0xe4] sm:$0xf]
    %v161 = vld [vmem:[#allocation7 + $0xe8] sm:$0xf]
    %v162 = vld [vmem:[#allocation7 + $0xec] sm:$0xf]
    %v163 = vld [vmem:[#allocation7 + $0xf0] sm:$0xf]
    %v164 = vld [vmem:[#allocation7 + $0xf4] sm:$0xf]
    %v165 = vld [vmem:[#allocation7 + $0xf8] sm:$0xf]
    %v166 = vld [vmem:[#allocation7 + $0xfc] sm:$0xf]
    %v167 = vld [vmem:[#allocation7 + $0x100] sm:$0xf]
    %v168 = vld [vmem:[#allocation7 + $0x104] sm:$0xf]
    %v169 = vld [vmem:[#allocation7 + $0x108] sm:$0xf]
    %v170 = vld [vmem:[#allocation7 + $0x10c] sm:$0xf]
    %v171 = vld [vmem:[#allocation7 + $0x110] sm:$0xf]
    %v172 = vld [vmem:[#allocation7 + $0x114] sm:$0xf]
    %v173 = vld [vmem:[#allocation7 + $0x118] sm:$0xf]
    %v174 = vld [vmem:[#allocation7 + $0x11c] sm:$0xf]
    %v175 = vld [vmem:[#allocation7 + $0x120] sm:$0xf]
    %v176 = vld [vmem:[#allocation7 + $0x124] sm:$0xf]
    %v177 = vld [vmem:[#allocation7 + $0x128] sm:$0xf]
    %v178 = vld [vmem:[#allocation7 + $0x12c] sm:$0xf]
    %v179 = vld [vmem:[#allocation7 + $0x130] sm:$0xf]
    %v180 = vld [vmem:[#allocation7 + $0x134] sm:$0xf]
    %v181 = vld [vmem:[#allocation7 + $0x138] sm:$0xf]
    %v182 = vld [vmem:[#allocation7 + $0x13c] sm:$0xf]
    %v183 = vld [vmem:[#allocation7 + $0x140] sm:$0xf]
    %v184 = vld [vmem:[#allocation7 + $0x144] sm:$0xf]
    %v185 = vld [vmem:[#allocation7 + $0x148] sm:$0xf]
    %v186 = vld [vmem:[#allocation7 + $0x14c] sm:$0xf]
    %v187 = vld [vmem:[#allocation7 + $0x150] sm:$0xf]
    %v188 = vld [vmem:[#allocation7 + $0x154] sm:$0xf]
    %v189 = vld [vmem:[#allocation7 + $0x158] sm:$0xf]
    %v190 = vld [vmem:[#allocation7 + $0x15c] sm:$0xf]
    %v191 = vld [vmem:[#allocation7 + $0x160] sm:$0xf]
    %v192 = vld [vmem:[#allocation7 + $0x164] sm:$0xf]
    %v193 = vld [vmem:[#allocation7 + $0x168] sm:$0xf]
    %v194 = vld [vmem:[#allocation7 + $0x16c] sm:$0xf]
    %v195 = vld [vmem:[#allocation7 + $0x170] sm:$0xf]
    %v196 = vld [vmem:[#allocation7 + $0x174] sm:$0xf]
    %v197 = vld [vmem:[#allocation7 + $0x178] sm:$0xf]
    %v198 = vld [vmem:[#allocation7 + $0x17c] sm:$0xf]
    %v199 = vld [vmem:[#allocation7 + $0x180] sm:$0xf]
    %v200 = vld [vmem:[#allocation7 + $0x184] sm:$0xf]
    %v201 = vld [vmem:[#allocation7 + $0x188] sm:$0xf]
    %v202 = vld [vmem:[#allocation7 + $0x18c] sm:$0xf]
    %v203 = vld [vmem:[#allocation7 + $0x190] sm:$0xf]
    %v204 = vld [vmem:[#allocation7 + $0x194] sm:$0xf]
    %v205 = vld [vmem:[#allocation7 + $0x198] sm:$0xf]
    %v206 = vld [vmem:[#allocation7 + $0x19c] sm:$0xf]
    %v207 = vld [vmem:[#allocation7 + $0x1a0] sm:$0xf]
    %v208 = vld [vmem:[#allocation7 + $0x1a4] sm:$0xf]
    %v209 = vld [vmem:[#allocation7 + $0x1a8] sm:$0xf]
    %v210 = vld [vmem:[#allocation7 + $0x1ac] sm:$0xf]
    %v211 = vld [vmem:[#allocation7 + $0x1b0] sm:$0xf]
    %v212 = vld [vmem:[#allocation7 + $0x1b4] sm:$0xf]
    %v213 = vld [vmem:[#allocation7 + $0x1b8] sm:$0xf]
    %v214 = vld [vmem:[#allocation7 + $0x1bc] sm:$0xf]
    %v215 = vld [vmem:[#allocation7 + $0x1c0] sm:$0xf]
    %v216 = vld [vmem:[#allocation7 + $0x1c4] sm:$0xf]
    %v217 = vld [vmem:[#allocation7 + $0x1c8] sm:$0xf]
    %v218 = vld [vmem:[#allocation7 + $0x1cc] sm:$0xf]
    %v219 = vld [vmem:[#allocation7 + $0x1d0] sm:$0xf]
    %v220 = vld [vmem:[#allocation7 + $0x1d4] sm:$0xf]
    %v221 = vld [vmem:[#allocation7 + $0x1d8] sm:$0xf]
    %v222 = vld [vmem:[#allocation7 + $0x1dc] sm:$0xf]
    %v223 = vld [vmem:[#allocation7 + $0x1e0] sm:$0xf]
    %v224 = vld [vmem:[#allocation7 + $0x1e4] sm:$0xf]
    %v225 = vld [vmem:[#allocation7 + $0x1e8] sm:$0xf]
    %v226 = vld [vmem:[#allocation7 + $0x1ec] sm:$0xf]
    %v227 = vld [vmem:[#allocation7 + $0x1f0] sm:$0xf]
    %v228 = vlaneseq
    %v229 = vshrl.u32 %v228, 7
    %v230 = vsub.s32 0, %v229
    %v231 = vrot.slane %v101, %v230
    %v233 = vcombine.high %v102, %v102
    %v235 = vunpack.c.l.s4 1966171168
    %v236 = vunpack.c.0.s8 %v235
    %v237 = vlaneseq
    %v238 = vshrl.u32 %v237, 7
    %v239 = vsub.s32 %v236, %v238
    %v240 = vrot.slane %v102, %v239
    %v242 = vunpack.c.l.s4 1966171168
    %v243 = vunpack.c.0.s8 %v242
    %v244 = vlaneseq
    %v245 = vshrl.u32 %v244, 7
    %v246 = vsub.s32 %v243, %v245
    %v247 = vrot.slane %v233, %v246
    %v248 = vcombine.high %v240, %v240
    %v249 = vcombine.high %v247, %v247
    %v251 = vunpack.c.l.s4 1966171168
    %v252 = vunpack.c.0.s8 %v251
    %v253 = vlaneseq
    %v254 = vshrl.u32 %v253, 7
    %v255 = vsub.s32 %v252, %v254
    %v256 = vrot.slane %v240, %v255
    %v258 = vunpack.c.l.s4 1966171168
    %v259 = vunpack.c.0.s8 %v258
    %v260 = vlaneseq
    %v261 = vshrl.u32 %v260, 7
    %v262 = vsub.s32 %v259, %v261
    %v263 = vrot.slane %v247, %v262
    %v265 = vunpack.c.l.s4 1966171168
    %v266 = vunpack.c.0.s8 %v265
    %v267 = vlaneseq
    %v268 = vshrl.u32 %v267, 7
    %v269 = vsub.s32 %v266, %v268
    %v270 = vrot.slane %v248, %v269
    %v272 = vunpack.c.l.s4 1966171168
    %v273 = vunpack.c.0.s8 %v272
    %v274 = vlaneseq
    %v275 = vshrl.u32 %v274, 7
    %v276 = vsub.s32 %v273, %v275
    %v277 = vrot.slane %v249, %v276
    %v278 = vcombine.high %v256, %v256
    %v279 = vcombine.high %v263, %v263
    %v280 = vcombine.high %v270, %v270
    %v281 = vcombine.high %v277, %v277
    %v414 = vunpack.c.l.b16 %v103
    %v415 = vunpack.c.l.b16 %v104
    %v416 = vunpack.c.l.b16 %v105
    %v417 = vunpack.c.l.b16 %v106
    %v418 = vunpack.c.l.b16 %v107
    %v419 = vunpack.c.l.b16 %v108
    %v420 = vunpack.c.l.b16 %v109
    %v421 = vunpack.c.l.b16 %v110
    %v422 = vunpack.c.l.b16 %v111
    %v423 = vunpack.c.l.b16 %v112
    %v424 = vunpack.c.l.b16 %v113
    %v425 = vunpack.c.l.b16 %v114
    %v426 = vunpack.c.l.b16 %v115
    %v427 = vunpack.c.l.b16 %v116
    %v428 = vunpack.c.l.b16 %v117
    %v429 = vunpack.c.l.b16 %v118
    %v430 = vunpack.c.l.b16 %v119
    %v431 = vunpack.c.l.b16 %v120
    %v432 = vunpack.c.l.b16 %v121
    %v433 = vunpack.c.l.b16 %v122
    %v434 = vunpack.c.l.b16 %v123
    %v435 = vunpack.c.l.b16 %v124
    %v436 = vunpack.c.l.b16 %v125
    %v437 = vunpack.c.l.b16 %v126
    %v438 = vunpack.c.l.b16 %v127
    %v439 = vunpack.c.l.b16 %v128
    %v440 = vunpack.c.l.b16 %v129
    %v441 = vunpack.c.l.b16 %v130
    %v442 = vunpack.c.l.b16 %v131
    %v443 = vunpack.c.l.b16 %v132
    %v444 = vunpack.c.l.b16 %v133
    %v445 = vunpack.c.l.b16 %v134
    %v446 = vunpack.c.l.b16 %v135
    %v447 = vunpack.c.l.b16 %v136
    %v448 = vunpack.c.l.b16 %v137
    %v449 = vunpack.c.l.b16 %v138
    %v450 = vunpack.c.l.b16 %v139
    %v451 = vunpack.c.l.b16 %v140
    %v452 = vunpack.c.l.b16 %v141
    %v453 = vunpack.c.l.b16 %v142
    %v454 = vunpack.c.l.b16 %v143
    %v455 = vunpack.c.l.b16 %v144
    %v456 = vunpack.c.l.b16 %v145
    %v457 = vunpack.c.l.b16 %v146
    %v458 = vunpack.c.l.b16 %v147
    %v459 = vunpack.c.l.b16 %v148
    %v460 = vunpack.c.l.b16 %v149
    %v461 = vunpack.c.l.b16 %v150
    %v462 = vunpack.c.l.b16 %v151
    %v463 = vunpack.c.l.b16 %v152
    %v464 = vunpack.c.l.b16 %v153
    %v465 = vunpack.c.l.b16 %v154
    %v466 = vunpack.c.l.b16 %v155
    %v467 = vunpack.c.l.b16 %v156
    %v468 = vunpack.c.l.b16 %v157
    %v469 = vunpack.c.l.b16 %v158
    %v470 = vunpack.c.l.b16 %v159
    %v471 = vunpack.c.l.b16 %v160
    %v472 = vunpack.c.l.b16 %v161
    %v473 = vunpack.c.l.b16 %v162
    %v474 = vunpack.c.l.b16 %v163
    %v475 = vunpack.c.l.b16 %v164
    %v476 = vunpack.c.l.b16 %v165
    %v477 = vunpack.c.l.b16 %v166
    %v478 = vunpack.c.l.b16 %v167
    %v479 = vunpack.c.l.b16 %v168
    %v480 = vunpack.c.l.b16 %v169
    %v481 = vunpack.c.l.b16 %v170
    %v482 = vunpack.c.l.b16 %v171
    %v483 = vunpack.c.l.b16 %v172
    %v484 = vunpack.c.l.b16 %v173
    %v485 = vunpack.c.l.b16 %v174
    %v486 = vunpack.c.l.b16 %v175
    %v487 = vunpack.c.l.b16 %v176
    %v488 = vunpack.c.l.b16 %v177
    %v489 = vunpack.c.l.b16 %v178
    %v490 = vunpack.c.l.b16 %v179
    %v491 = vunpack.c.l.b16 %v180
    %v492 = vunpack.c.l.b16 %v181
    %v493 = vunpack.c.l.b16 %v182
    %v494 = vunpack.c.l.b16 %v183
    %v495 = vunpack.c.l.b16 %v184
    %v496 = vunpack.c.l.b16 %v185
    %v497 = vunpack.c.l.b16 %v186
    %v498 = vunpack.c.l.b16 %v187
    %v499 = vunpack.c.l.b16 %v188
    %v500 = vunpack.c.l.b16 %v189
    %v501 = vunpack.c.l.b16 %v190
    %v502 = vunpack.c.l.b16 %v191
    %v503 = vunpack.c.l.b16 %v192
    %v504 = vunpack.c.l.b16 %v193
    %v505 = vunpack.c.l.b16 %v194
    %v506 = vunpack.c.l.b16 %v195
    %v507 = vunpack.c.l.b16 %v196
    %v508 = vunpack.c.l.b16 %v197
    %v509 = vunpack.c.l.b16 %v198
    %v510 = vunpack.c.l.b16 %v199
    %v511 = vunpack.c.l.b16 %v200
    %v512 = vunpack.c.l.b16 %v201
    %v513 = vunpack.c.l.b16 %v202
    %v514 = vunpack.c.l.b16 %v203
    %v515 = vunpack.c.l.b16 %v204
    %v516 = vunpack.c.l.b16 %v205
    %v517 = vunpack.c.l.b16 %v206
    %v518 = vunpack.c.l.b16 %v207
    %v519 = vunpack.c.l.b16 %v208
    %v520 = vunpack.c.l.b16 %v209
    %v521 = vunpack.c.l.b16 %v210
    %v522 = vunpack.c.l.b16 %v211
    %v523 = vunpack.c.l.b16 %v212
    %v524 = vunpack.c.l.b16 %v213
    %v525 = vunpack.c.l.b16 %v214
    %v526 = vunpack.c.l.b16 %v215
    %v527 = vunpack.c.l.b16 %v216
    %v528 = vunpack.c.l.b16 %v217
    %v529 = vunpack.c.l.b16 %v218
    %v530 = vunpack.c.l.b16 %v219
    %v531 = vunpack.c.l.b16 %v220
    %v532 = vunpack.c.l.b16 %v221
    %v533 = vunpack.c.l.b16 %v222
    %v534 = vunpack.c.l.b16 %v223
    %v535 = vunpack.c.l.b16 %v224
    %v536 = vunpack.c.l.b16 %v225
    %v537 = vunpack.c.l.b16 %v226
    %v538 = vunpack.c.l.b16 %v227
    %v539 = vpack.c.b16 %v415, %v414
    %v540 = vpack.c.b16 %v417, %v416
    %v541 = vpack.c.b16 %v419, %v418
    %v542 = vpack.c.b16 %v421, %v420
    %v543 = vpack.c.b16 %v423, %v422
    %v544 = vpack.c.b16 %v425, %v424
    %v545 = vpack.c.b16 %v427, %v426
    %v546 = vpack.c.b16 %v429, %v428
    %v547 = vpack.c.b16 %v431, %v430
    %v548 = vpack.c.b16 %v433, %v432
    %v549 = vpack.c.b16 %v435, %v434
    %v550 = vpack.c.b16 %v437, %v436
    %v551 = vpack.c.b16 %v439, %v438
    %v552 = vpack.c.b16 %v441, %v440
    %v553 = vpack.c.b16 %v443, %v442
    %v554 = vpack.c.b16 %v445, %v444
    %v555 = vpack.c.b16 %v447, %v446
    %v556 = vpack.c.b16 %v449, %v448
    %v557 = vpack.c.b16 %v451, %v450
    %v558 = vpack.c.b16 %v453, %v452
    %v559 = vpack.c.b16 %v455, %v454
    %v560 = vpack.c.b16 %v457, %v456
    %v561 = vpack.c.b16 %v459, %v458
    %v562 = vpack.c.b16 %v461, %v460
    %v563 = vpack.c.b16 %v463, %v462
    %v564 = vpack.c.b16 %v465, %v464
    %v565 = vpack.c.b16 %v467, %v466
    %v566 = vpack.c.b16 %v469, %v468
    %v567 = vpack.c.b16 %v471, %v470
    %v568 = vpack.c.b16 %v473, %v472
    %v569 = vpack.c.b16 %v475, %v474
    %v570 = vpack.c.b16 %v477, %v476
    %v571 = vpack.c.b16 %v479, %v478
    %v572 = vpack.c.b16 %v481, %v480
    %v573 = vpack.c.b16 %v483, %v482
    %v574 = vpack.c.b16 %v485, %v484
    %v575 = vpack.c.b16 %v487, %v486
    %v576 = vpack.c.b16 %v489, %v488
    %v577 = vpack.c.b16 %v491, %v490
    %v578 = vpack.c.b16 %v493, %v492
    %v579 = vpack.c.b16 %v495, %v494
    %v580 = vpack.c.b16 %v497, %v496
    %v581 = vpack.c.b16 %v499, %v498
    %v582 = vpack.c.b16 %v501, %v500
    %v583 = vpack.c.b16 %v503, %v502
    %v584 = vpack.c.b16 %v505, %v504
    %v585 = vpack.c.b16 %v507, %v506
    %v586 = vpack.c.b16 %v509, %v508
    %v587 = vpack.c.b16 %v511, %v510
    %v588 = vpack.c.b16 %v513, %v512
    %v589 = vpack.c.b16 %v515, %v514
    %v590 = vpack.c.b16 %v517, %v516
    %v591 = vpack.c.b16 %v519, %v518
    %v592 = vpack.c.b16 %v521, %v520
    %v593 = vpack.c.b16 %v523, %v522
    %v594 = vpack.c.b16 %v525, %v524
    %v595 = vpack.c.b16 %v527, %v526
    %v596 = vpack.c.b16 %v529, %v528
    %v597 = vpack.c.b16 %v531, %v530
    %v598 = vpack.c.b16 %v533, %v532
    %v599 = vpack.c.b16 %v535, %v534
    %v600 = vpack.c.b16 %v537, %v536
    %v601 = vpack.c.b16 %v538, %v538
    %vm664 = vcmask 850944
    %v666 = vsel %vm664, %v281, 0
    %vm668 = vcmask 1043456
    %v670 = vsel %vm668, %v601, 0
    %672 = vmatprep.subr.bf16.mxu0 0
    %673 = vmatpush1.bf16.msra.mxu0 %v546
    %674 = vmatprep.subr.bf16.mxu0 0
    %675 = vmatpush1.bf16.msra.mxu0 %v545
    %676 = vmatprep.subr.bf16.mxu0 0
    %677 = vmatpush1.bf16.msra.mxu0 %v544
    %678 = vmatprep.subr.bf16.mxu0 0
    %679 = vmatpush1.bf16.msra.mxu0 %v543
    %680 = vmatprep.subr.bf16.mxu0 0
    %681 = vmatpush1.bf16.msra.mxu0 %v542
    %682 = vmatprep.subr.bf16.mxu0 0
    %683 = vmatpush1.bf16.msra.mxu0 %v541
    %684 = vmatprep.subr.bf16.mxu0 0
    %685 = vmatpush1.bf16.msra.mxu0 %v540
    %686 = vmatprep.subr.bf16.mxu0 0
    %687 = vmatpush1.bf16.msra.mxu0 %v539
    %688 = vmatprep.subr.bf16.mxu0 0
    %689 = vmatpush2.bf16.msra.mxu0 %v554
    %690 = vmatprep.subr.bf16.mxu0 0
    %691 = vmatpush2.bf16.msra.mxu0 %v553
    %692 = vmatprep.subr.bf16.mxu0 0
    %693 = vmatpush2.bf16.msra.mxu0 %v552
    %694 = vmatprep.subr.bf16.mxu0 0
    %695 = vmatpush2.bf16.msra.mxu0 %v551
    %696 = vmatprep.subr.bf16.mxu0 0
    %697 = vmatpush2.bf16.msra.mxu0 %v550
    %698 = vmatprep.subr.bf16.mxu0 0
    %699 = vmatpush2.bf16.msra.mxu0 %v549
    %700 = vmatprep.subr.bf16.mxu0 0
    %701 = vmatpush2.bf16.msra.mxu0 %v548
    %702 = vmatprep.subr.bf16.mxu0 0
    %703 = vmatpush2.bf16.msra.mxu0 %v547
    %704 = vmatprep.mubr.bf16.mxu0 %v270
    %705 = vmatmul.mubr.bf16.gmra.mxu0 %v256
    %v706 = vpop.f32.mrf.mxu0
    %v707 = vadd.f32 %v231, %v706
    %v708 = vpop.f32.mrf.mxu0
    %v709 = vpop.f32.mrf.mxu0
    %v710 = vpop.f32.mrf.mxu0
    %711 = vdwg.mxu0
    %712 = vmatprep.subr.bf16.mxu0 0
    %713 = vmatpush1.bf16.msra.mxu0 %v562
    %714 = vmatprep.subr.bf16.mxu0 0
    %715 = vmatpush1.bf16.msra.mxu0 %v561
    %716 = vmatprep.subr.bf16.mxu0 0
    %717 = vmatpush1.bf16.msra.mxu0 %v560
    %718 = vmatprep.subr.bf16.mxu0 0
    %719 = vmatpush1.bf16.msra.mxu0 %v559
    %720 = vmatprep.subr.bf16.mxu0 0
    %721 = vmatpush1.bf16.msra.mxu0 %v558
    %722 = vmatprep.subr.bf16.mxu0 0
    %723 = vmatpush1.bf16.msra.mxu0 %v557
    %724 = vmatprep.subr.bf16.mxu0 0
    %725 = vmatpush1.bf16.msra.mxu0 %v556
    %726 = vmatprep.subr.bf16.mxu0 0
    %727 = vmatpush1.bf16.msra.mxu0 %v555
    %728 = vmatprep.subr.bf16.mxu0 0
    %729 = vmatpush2.bf16.msra.mxu0 %v570
    %730 = vmatprep.subr.bf16.mxu0 0
    %731 = vmatpush2.bf16.msra.mxu0 %v569
    %732 = vmatprep.subr.bf16.mxu0 0
    %733 = vmatpush2.bf16.msra.mxu0 %v568
    %734 = vmatprep.subr.bf16.mxu0 0
    %735 = vmatpush2.bf16.msra.mxu0 %v567
    %736 = vmatprep.subr.bf16.mxu0 0
    %737 = vmatpush2.bf16.msra.mxu0 %v566
    %738 = vmatprep.subr.bf16.mxu0 0
    %739 = vmatpush2.bf16.msra.mxu0 %v565
    %740 = vmatprep.subr.bf16.mxu0 0
    %741 = vmatpush2.bf16.msra.mxu0 %v564
    %742 = vmatprep.subr.bf16.mxu0 0
    %743 = vmatpush2.bf16.msra.mxu0 %v563
    %744 = vmatprep.mubr.bf16.mxu0 %v280
    %745 = vmatmul.mubr.bf16.gmra.mxu0 %v278
    %v746 = vpop.f32.mrf.mxu0
    %v747 = vadd.f32 %v707, %v746
    %v748 = vpop.f32.mrf.mxu0
    %v749 = vpop.f32.mrf.mxu0
    %v750 = vpop.f32.mrf.mxu0
    %751 = vdwg.mxu0
    %752 = vmatprep.subr.bf16.mxu0 0
    %753 = vmatpush1.bf16.msra.mxu0 %v578
    %754 = vmatprep.subr.bf16.mxu0 0
    %755 = vmatpush1.bf16.msra.mxu0 %v577
    %756 = vmatprep.subr.bf16.mxu0 0
    %757 = vmatpush1.bf16.msra.mxu0 %v576
    %758 = vmatprep.subr.bf16.mxu0 0
    %759 = vmatpush1.bf16.msra.mxu0 %v575
    %760 = vmatprep.subr.bf16.mxu0 0
    %761 = vmatpush1.bf16.msra.mxu0 %v574
    %762 = vmatprep.subr.bf16.mxu0 0
    %763 = vmatpush1.bf16.msra.mxu0 %v573
    %764 = vmatprep.subr.bf16.mxu0 0
    %765 = vmatpush1.bf16.msra.mxu0 %v572
    %766 = vmatprep.subr.bf16.mxu0 0
    %767 = vmatpush1.bf16.msra.mxu0 %v571
    %768 = vmatprep.subr.bf16.mxu0 0
    %769 = vmatpush2.bf16.msra.mxu0 %v586
    %770 = vmatprep.subr.bf16.mxu0 0
    %771 = vmatpush2.bf16.msra.mxu0 %v585
    %772 = vmatprep.subr.bf16.mxu0 0
    %773 = vmatpush2.bf16.msra.mxu0 %v584
    %774 = vmatprep.subr.bf16.mxu0 0
    %775 = vmatpush2.bf16.msra.mxu0 %v583
    %776 = vmatprep.subr.bf16.mxu0 0
    %777 = vmatpush2.bf16.msra.mxu0 %v582
    %778 = vmatprep.subr.bf16.mxu0 0
    %779 = vmatpush2.bf16.msra.mxu0 %v581
    %780 = vmatprep.subr.bf16.mxu0 0
    %781 = vmatpush2.bf16.msra.mxu0 %v580
    %782 = vmatprep.subr.bf16.mxu0 0
    %783 = vmatpush2.bf16.msra.mxu0 %v579
    %784 = vmatprep.mubr.bf16.mxu0 %v277
    %785 = vmatmul.mubr.bf16.gmra.mxu0 %v263
    %v786 = vpop.f32.mrf.mxu0
    %v787 = vadd.f32 %v747, %v786
    %v788 = vpop.f32.mrf.mxu0
    %v789 = vpop.f32.mrf.mxu0
    %v790 = vpop.f32.mrf.mxu0
    %791 = vdwg.mxu0
    %792 = vmatprep.subr.bf16.mxu0 0
    %793 = vmatpush1.bf16.msra.mxu0 %v594
    %794 = vmatprep.subr.bf16.mxu0 0
    %795 = vmatpush1.bf16.msra.mxu0 %v593
    %796 = vmatprep.subr.bf16.mxu0 0
    %797 = vmatpush1.bf16.msra.mxu0 %v592
    %798 = vmatprep.subr.bf16.mxu0 0
    %799 = vmatpush1.bf16.msra.mxu0 %v591
    %800 = vmatprep.subr.bf16.mxu0 0
    %801 = vmatpush1.bf16.msra.mxu0 %v590
    %802 = vmatprep.subr.bf16.mxu0 0
    %803 = vmatpush1.bf16.msra.mxu0 %v589
    %804 = vmatprep.subr.bf16.mxu0 0
    %805 = vmatpush1.bf16.msra.mxu0 %v588
    %806 = vmatprep.subr.bf16.mxu0 0
    %807 = vmatpush1.bf16.msra.mxu0 %v587
    %808 = vmatprep.subr.bf16.mxu0 0
    %809 = vmatpush2.bf16.msra.mxu0 0
    %810 = vmatprep.subr.bf16.mxu0 0
    %811 = vmatpush2.bf16.msra.mxu0 %v670
    %812 = vmatprep.subr.bf16.mxu0 0
    %813 = vmatpush2.bf16.msra.mxu0 %v600
    %814 = vmatprep.subr.bf16.mxu0 0
    %815 = vmatpush2.bf16.msra.mxu0 %v599
    %816 = vmatprep.subr.bf16.mxu0 0
    %817 = vmatpush2.bf16.msra.mxu0 %v598
    %818 = vmatprep.subr.bf16.mxu0 0
    %819 = vmatpush2.bf16.msra.mxu0 %v597
    %820 = vmatprep.subr.bf16.mxu0 0
    %821 = vmatpush2.bf16.msra.mxu0 %v596
    %822 = vmatprep.subr.bf16.mxu0 0
    %823 = vmatpush2.bf16.msra.mxu0 %v595
    %824 = vmatprep.mubr.bf16.mxu0 %v666
    %825 = vmatmul.mubr.bf16.gmra.mxu0 %v279
    %v826 = vpop.f32.mrf.mxu0
    %v827 = vadd.f32 %v787, %v826
    %v828 = vpop.f32.mrf.mxu0
    %v829 = vpop.f32.mrf.mxu0
    %v830 = vpop.f32.mrf.mxu0
    %831 = vdwg.mxu0
    %v832 = vld [vmem:[#allocation5] sm:$0x3f]
    %v833 = vld [vmem:[#allocation8] sm:$0xf]
    %v834 = vld [vmem:[#allocation8 + $0x4] sm:$0xf]
    %v835 = vld [vmem:[#allocation8 + $0x8] sm:$0xf]
    %v836 = vld [vmem:[#allocation8 + $0xc] sm:$0xf]
    %v837 = vld [vmem:[#allocation8 + $0x10] sm:$0xf]
    %v838 = vld [vmem:[#allocation8 + $0x14] sm:$0xf]
    %v839 = vld [vmem:[#allocation8 + $0x18] sm:$0xf]
    %v840 = vld [vmem:[#allocation8 + $0x1c] sm:$0xf]
    %v841 = vld [vmem:[#allocation8 + $0x20] sm:$0xf]
    %v842 = vld [vmem:[#allocation8 + $0x24] sm:$0xf]
    %v843 = vld [vmem:[#allocation8 + $0x28] sm:$0xf]
    %v844 = vld [vmem:[#allocation8 + $0x2c] sm:$0xf]
    %v845 = vld [vmem:[#allocation8 + $0x30] sm:$0xf]
    %v846 = vld [vmem:[#allocation8 + $0x34] sm:$0xf]
    %v847 = vld [vmem:[#allocation8 + $0x38] sm:$0xf]
    %v848 = vld [vmem:[#allocation8 + $0x3c] sm:$0xf]
    %v849 = vld [vmem:[#allocation8 + $0x40] sm:$0xf]
    %v850 = vld [vmem:[#allocation8 + $0x44] sm:$0xf]
    %v851 = vld [vmem:[#allocation8 + $0x48] sm:$0xf]
    %v852 = vld [vmem:[#allocation8 + $0x4c] sm:$0xf]
    %v853 = vld [vmem:[#allocation8 + $0x50] sm:$0xf]
    %v854 = vld [vmem:[#allocation8 + $0x54] sm:$0xf]
    %v855 = vld [vmem:[#allocation8 + $0x58] sm:$0xf]
    %v856 = vld [vmem:[#allocation8 + $0x5c] sm:$0xf]
    %v857 = vld [vmem:[#allocation8 + $0x60] sm:$0xf]
    %v858 = vld [vmem:[#allocation8 + $0x64] sm:$0xf]
    %v859 = vld [vmem:[#allocation8 + $0x68] sm:$0xf]
    %v860 = vld [vmem:[#allocation8 + $0x6c] sm:$0xf]
    %v861 = vld [vmem:[#allocation8 + $0x70] sm:$0xf]
    %v862 = vld [vmem:[#allocation8 + $0x74] sm:$0xf]
    %v863 = vld [vmem:[#allocation8 + $0x78] sm:$0xf]
    %v864 = vld [vmem:[#allocation8 + $0x7c] sm:$0xf]
    %v865 = vld [vmem:[#allocation8 + $0x80] sm:$0xf]
    %v866 = vld [vmem:[#allocation8 + $0x84] sm:$0xf]
    %v867 = vld [vmem:[#allocation8 + $0x88] sm:$0xf]
    %v868 = vld [vmem:[#allocation8 + $0x8c] sm:$0xf]
    %v869 = vld [vmem:[#allocation8 + $0x90] sm:$0xf]
    %v870 = vld [vmem:[#allocation8 + $0x94] sm:$0xf]
    %v871 = vld [vmem:[#allocation8 + $0x98] sm:$0xf]
    %v872 = vld [vmem:[#allocation8 + $0x9c] sm:$0xf]
    %v873 = vld [vmem:[#allocation8 + $0xa0] sm:$0xf]
    %v874 = vld [vmem:[#allocation8 + $0xa4] sm:$0xf]
    %v875 = vld [vmem:[#allocation8 + $0xa8] sm:$0xf]
    %v876 = vld [vmem:[#allocation8 + $0xac] sm:$0xf]
    %v877 = vld [vmem:[#allocation8 + $0xb0] sm:$0xf]
    %v878 = vld [vmem:[#allocation8 + $0xb4] sm:$0xf]
    %v879 = vld [vmem:[#allocation8 + $0xb8] sm:$0xf]
    %v880 = vld [vmem:[#allocation8 + $0xbc] sm:$0xf]
    %v881 = vld [vmem:[#allocation8 + $0xc0] sm:$0xf]
    %v882 = vld [vmem:[#allocation8 + $0xc4] sm:$0xf]
    %v883 = vld [vmem:[#allocation8 + $0xc8] sm:$0xf]
    %v884 = vld [vmem:[#allocation8 + $0xcc] sm:$0xf]
    %v885 = vld [vmem:[#allocation8 + $0xd0] sm:$0xf]
    %v886 = vld [vmem:[#allocation8 + $0xd4] sm:$0xf]
    %v887 = vld [vmem:[#allocation8 + $0xd8] sm:$0xf]
    %v888 = vld [vmem:[#allocation8 + $0xdc] sm:$0xf]
    %v889 = vld [vmem:[#allocation8 + $0xe0] sm:$0xf]
    %v890 = vld [vmem:[#allocation8 + $0xe4] sm:$0xf]
    %v891 = vld [vmem:[#allocation8 + $0xe8] sm:$0xf]
    %v892 = vld [vmem:[#allocation8 + $0xec] sm:$0xf]
    %v893 = vld [vmem:[#allocation8 + $0xf0] sm:$0xf]
    %v894 = vld [vmem:[#allocation8 + $0xf4] sm:$0xf]
    %v895 = vld [vmem:[#allocation8 + $0xf8] sm:$0xf]
    %v896 = vld [vmem:[#allocation8 + $0xfc] sm:$0xf]
    %v897 = vld [vmem:[#allocation8 + $0x100] sm:$0xf]
    %v898 = vld [vmem:[#allocation8 + $0x104] sm:$0xf]
    %v899 = vld [vmem:[#allocation8 + $0x108] sm:$0xf]
    %v900 = vld [vmem:[#allocation8 + $0x10c] sm:$0xf]
    %v901 = vld [vmem:[#allocation8 + $0x110] sm:$0xf]
    %v902 = vld [vmem:[#allocation8 + $0x114] sm:$0xf]
    %v903 = vld [vmem:[#allocation8 + $0x118] sm:$0xf]
    %v904 = vld [vmem:[#allocation8 + $0x11c] sm:$0xf]
    %v905 = vld [vmem:[#allocation8 + $0x120] sm:$0xf]
    %v906 = vld [vmem:[#allocation8 + $0x124] sm:$0xf]
    %v907 = vld [vmem:[#allocation8 + $0x128] sm:$0xf]
    %v908 = vld [vmem:[#allocation8 + $0x12c] sm:$0xf]
    %v909 = vld [vmem:[#allocation8 + $0x130] sm:$0xf]
    %v910 = vld [vmem:[#allocation8 + $0x134] sm:$0xf]
    %v911 = vld [vmem:[#allocation8 + $0x138] sm:$0xf]
    %v912 = vld [vmem:[#allocation8 + $0x13c] sm:$0xf]
    %v913 = vld [vmem:[#allocation8 + $0x140] sm:$0xf]
    %v914 = vld [vmem:[#allocation8 + $0x144] sm:$0xf]
    %v915 = vld [vmem:[#allocation8 + $0x148] sm:$0xf]
    %v916 = vld [vmem:[#allocation8 + $0x14c] sm:$0xf]
    %v917 = vld [vmem:[#allocation8 + $0x150] sm:$0xf]
    %v918 = vld [vmem:[#allocation8 + $0x154] sm:$0xf]
    %v919 = vld [vmem:[#allocation8 + $0x158] sm:$0xf]
    %v920 = vld [vmem:[#allocation8 + $0x15c] sm:$0xf]
    %v921 = vld [vmem:[#allocation8 + $0x160] sm:$0xf]
    %v922 = vld [vmem:[#allocation8 + $0x164] sm:$0xf]
    %v923 = vld [vmem:[#allocation8 + $0x168] sm:$0xf]
    %v924 = vld [vmem:[#allocation8 + $0x16c] sm:$0xf]
    %v925 = vld [vmem:[#allocation8 + $0x170] sm:$0xf]
    %v926 = vld [vmem:[#allocation8 + $0x174] sm:$0xf]
    %v927 = vld [vmem:[#allocation8 + $0x178] sm:$0xf]
    %v928 = vld [vmem:[#allocation8 + $0x17c] sm:$0xf]
    %v929 = vlaneseq
    %v930 = vshrl.u32 %v929, 7
    %v931 = vsub.s32 1, %v930
    %v932 = vrot.slane %v101, %v931
    %v934 = vcombine.high %v832, %v832
    %v936 = vunpack.c.l.s4 1966171168
    %v937 = vunpack.c.0.s8 %v936
    %v938 = vlaneseq
    %v939 = vshrl.u32 %v938, 7
    %v940 = vsub.s32 %v937, %v939
    %v941 = vrot.slane %v832, %v940
    %v943 = vunpack.c.l.s4 1966171168
    %v944 = vunpack.c.0.s8 %v943
    %v945 = vlaneseq
    %v946 = vshrl.u32 %v945, 7
    %v947 = vsub.s32 %v944, %v946
    %v948 = vrot.slane %v934, %v947
    %v949 = vcombine.high %v941, %v941
    %v950 = vcombine.high %v948, %v948
    %v952 = vunpack.c.l.s4 1966171168
    %v953 = vunpack.c.0.s8 %v952
    %v954 = vlaneseq
    %v955 = vshrl.u32 %v954, 7
    %v956 = vsub.s32 %v953, %v955
    %v957 = vrot.slane %v941, %v956
    %v959 = vunpack.c.l.s4 1966171168
    %v960 = vunpack.c.0.s8 %v959
    %v961 = vlaneseq
    %v962 = vshrl.u32 %v961, 7
    %v963 = vsub.s32 %v960, %v962
    %v964 = vrot.slane %v948, %v963
    %v966 = vunpack.c.l.s4 1966171168
    %v967 = vunpack.c.0.s8 %v966
    %v968 = vlaneseq
    %v969 = vshrl.u32 %v968, 7
    %v970 = vsub.s32 %v967, %v969
    %v971 = vrot.slane %v949, %v970
    %v973 = vunpack.c.l.s4 1966171168
    %v974 = vunpack.c.0.s8 %v973
    %v975 = vlaneseq
    %v976 = vshrl.u32 %v975, 7
    %v977 = vsub.s32 %v974, %v976
    %v978 = vrot.slane %v950, %v977
    %v979 = vcombine.high %v957, %v957
    %v980 = vcombine.high %v971, %v971
    %v1083 = vunpack.c.l.b16 %v833
    %v1084 = vunpack.c.l.b16 %v834
    %v1085 = vunpack.c.l.b16 %v835
    %v1086 = vunpack.c.l.b16 %v836
    %v1087 = vunpack.c.l.b16 %v837
    %v1088 = vunpack.c.l.b16 %v838
    %v1089 = vunpack.c.l.b16 %v839
    %v1090 = vunpack.c.l.b16 %v840
    %v1091 = vunpack.c.l.b16 %v841
    %v1092 = vunpack.c.l.b16 %v842
    %v1093 = vunpack.c.l.b16 %v843
    %v1094 = vunpack.c.l.b16 %v844
    %v1095 = vunpack.c.l.b16 %v845
    %v1096 = vunpack.c.l.b16 %v846
    %v1097 = vunpack.c.l.b16 %v847
    %v1098 = vunpack.c.l.b16 %v848
    %v1099 = vunpack.c.l.b16 %v849
    %v1100 = vunpack.c.l.b16 %v850
    %v1101 = vunpack.c.l.b16 %v851
    %v1102 = vunpack.c.l.b16 %v852
    %v1103 = vunpack.c.l.b16 %v853
    %v1104 = vunpack.c.l.b16 %v854
    %v1105 = vunpack.c.l.b16 %v855
    %v1106 = vunpack.c.l.b16 %v856
    %v1107 = vunpack.c.l.b16 %v857
    %v1108 = vunpack.c.l.b16 %v858
    %v1109 = vunpack.c.l.b16 %v859
    %v1110 = vunpack.c.l.b16 %v860
    %v1111 = vunpack.c.l.b16 %v861
    %v1112 = vunpack.c.l.b16 %v862
    %v1113 = vunpack.c.l.b16 %v863
    %v1114 = vunpack.c.l.b16 %v864
    %v1115 = vunpack.c.l.b16 %v865
    %v1116 = vunpack.c.l.b16 %v866
    %v1117 = vunpack.c.l.b16 %v867
    %v1118 = vunpack.c.l.b16 %v868
    %v1119 = vunpack.c.l.b16 %v869
    %v1120 = vunpack.c.l.b16 %v870
    %v1121 = vunpack.c.l.b16 %v871
    %v1122 = vunpack.c.l.b16 %v872
    %v1123 = vunpack.c.l.b16 %v873
    %v1124 = vunpack.c.l.b16 %v874
    %v1125 = vunpack.c.l.b16 %v875
    %v1126 = vunpack.c.l.b16 %v876
    %v1127 = vunpack.c.l.b16 %v877
    %v1128 = vunpack.c.l.b16 %v878
    %v1129 = vunpack.c.l.b16 %v879
    %v1130 = vunpack.c.l.b16 %v880
    %v1131 = vunpack.c.l.b16 %v881
    %v1132 = vunpack.c.l.b16 %v882
    %v1133 = vunpack.c.l.b16 %v883
    %v1134 = vunpack.c.l.b16 %v884
    %v1135 = vunpack.c.l.b16 %v885
    %v1136 = vunpack.c.l.b16 %v886
    %v1137 = vunpack.c.l.b16 %v887
    %v1138 = vunpack.c.l.b16 %v888
    %v1139 = vunpack.c.l.b16 %v889
    %v1140 = vunpack.c.l.b16 %v890
    %v1141 = vunpack.c.l.b16 %v891
    %v1142 = vunpack.c.l.b16 %v892
    %v1143 = vunpack.c.l.b16 %v893
    %v1144 = vunpack.c.l.b16 %v894
    %v1145 = vunpack.c.l.b16 %v895
    %v1146 = vunpack.c.l.b16 %v896
    %v1147 = vunpack.c.l.b16 %v897
    %v1148 = vunpack.c.l.b16 %v898
    %v1149 = vunpack.c.l.b16 %v899
    %v1150 = vunpack.c.l.b16 %v900
    %v1151 = vunpack.c.l.b16 %v901
    %v1152 = vunpack.c.l.b16 %v902
    %v1153 = vunpack.c.l.b16 %v903
    %v1154 = vunpack.c.l.b16 %v904
    %v1155 = vunpack.c.l.b16 %v905
    %v1156 = vunpack.c.l.b16 %v906
    %v1157 = vunpack.c.l.b16 %v907
    %v1158 = vunpack.c.l.b16 %v908
    %v1159 = vunpack.c.l.b16 %v909
    %v1160 = vunpack.c.l.b16 %v910
    %v1161 = vunpack.c.l.b16 %v911
    %v1162 = vunpack.c.l.b16 %v912
    %v1163 = vunpack.c.l.b16 %v913
    %v1164 = vunpack.c.l.b16 %v914
    %v1165 = vunpack.c.l.b16 %v915
    %v1166 = vunpack.c.l.b16 %v916
    %v1167 = vunpack.c.l.b16 %v917
    %v1168 = vunpack.c.l.b16 %v918
    %v1169 = vunpack.c.l.b16 %v919
    %v1170 = vunpack.c.l.b16 %v920
    %v1171 = vunpack.c.l.b16 %v921
    %v1172 = vunpack.c.l.b16 %v922
    %v1173 = vunpack.c.l.b16 %v923
    %v1174 = vunpack.c.l.b16 %v924
    %v1175 = vunpack.c.l.b16 %v925
    %v1176 = vunpack.c.l.b16 %v926
    %v1177 = vunpack.c.l.b16 %v927
    %v1178 = vunpack.c.l.b16 %v928
    %v1179 = vpack.c.b16 %v1084, %v1083
    %v1180 = vpack.c.b16 %v1086, %v1085
    %v1181 = vpack.c.b16 %v1088, %v1087
    %v1182 = vpack.c.b16 %v1090, %v1089
    %v1183 = vpack.c.b16 %v1092, %v1091
    %v1184 = vpack.c.b16 %v1094, %v1093
    %v1185 = vpack.c.b16 %v1096, %v1095
    %v1186 = vpack.c.b16 %v1098, %v1097
    %v1187 = vpack.c.b16 %v1100, %v1099
    %v1188 = vpack.c.b16 %v1102, %v1101
    %v1189 = vpack.c.b16 %v1104, %v1103
    %v1190 = vpack.c.b16 %v1106, %v1105
    %v1191 = vpack.c.b16 %v1108, %v1107
    %v1192 = vpack.c.b16 %v1110, %v1109
    %v1193 = vpack.c.b16 %v1112, %v1111
    %v1194 = vpack.c.b16 %v1114, %v1113
    %v1195 = vpack.c.b16 %v1116, %v1115
    %v1196 = vpack.c.b16 %v1118, %v1117
    %v1197 = vpack.c.b16 %v1120, %v1119
    %v1198 = vpack.c.b16 %v1122, %v1121
    %v1199 = vpack.c.b16 %v1124, %v1123
    %v1200 = vpack.c.b16 %v1126, %v1125
    %v1201 = vpack.c.b16 %v1128, %v1127
    %v1202 = vpack.c.b16 %v1130, %v1129
    %v1203 = vpack.c.b16 %v1132, %v1131
    %v1204 = vpack.c.b16 %v1134, %v1133
    %v1205 = vpack.c.b16 %v1136, %v1135
    %v1206 = vpack.c.b16 %v1138, %v1137
    %v1207 = vpack.c.b16 %v1140, %v1139
    %v1208 = vpack.c.b16 %v1142, %v1141
    %v1209 = vpack.c.b16 %v1144, %v1143
    %v1210 = vpack.c.b16 %v1146, %v1145
    %v1211 = vpack.c.b16 %v1148, %v1147
    %v1212 = vpack.c.b16 %v1150, %v1149
    %v1213 = vpack.c.b16 %v1152, %v1151
    %v1214 = vpack.c.b16 %v1154, %v1153
    %v1215 = vpack.c.b16 %v1156, %v1155
    %v1216 = vpack.c.b16 %v1158, %v1157
    %v1217 = vpack.c.b16 %v1160, %v1159
    %v1218 = vpack.c.b16 %v1162, %v1161
    %v1219 = vpack.c.b16 %v1164, %v1163
    %v1220 = vpack.c.b16 %v1166, %v1165
    %v1221 = vpack.c.b16 %v1168, %v1167
    %v1222 = vpack.c.b16 %v1170, %v1169
    %v1223 = vpack.c.b16 %v1172, %v1171
    %v1224 = vpack.c.b16 %v1174, %v1173
    %v1225 = vpack.c.b16 %v1176, %v1175
    %v1226 = vpack.c.b16 %v1178, %v1177
    %1275 = vmatprep.subr.bf16.mxu0 0
    %1276 = vmatpush1.bf16.msra.mxu0 %v1186
    %1277 = vmatprep.subr.bf16.mxu0 0
    %1278 = vmatpush1.bf16.msra.mxu0 %v1185
    %1279 = vmatprep.subr.bf16.mxu0 0
    %1280 = vmatpush1.bf16.msra.mxu0 %v1184
    %1281 = vmatprep.subr.bf16.mxu0 0
    %1282 = vmatpush1.bf16.msra.mxu0 %v1183
    %1283 = vmatprep.subr.bf16.mxu0 0
    %1284 = vmatpush1.bf16.msra.mxu0 %v1182
    %1285 = vmatprep.subr.bf16.mxu0 0
    %1286 = vmatpush1.bf16.msra.mxu0 %v1181
    %1287 = vmatprep.subr.bf16.mxu0 0
    %1288 = vmatpush1.bf16.msra.mxu0 %v1180
    %1289 = vmatprep.subr.bf16.mxu0 0
    %1290 = vmatpush1.bf16.msra.mxu0 %v1179
    %1291 = vmatprep.subr.bf16.mxu0 0
    %1292 = vmatpush2.bf16.msra.mxu0 %v1194
    %1293 = vmatprep.subr.bf16.mxu0 0
    %1294 = vmatpush2.bf16.msra.mxu0 %v1193
    %1295 = vmatprep.subr.bf16.mxu0 0
    %1296 = vmatpush2.bf16.msra.mxu0 %v1192
    %1297 = vmatprep.subr.bf16.mxu0 0
    %1298 = vmatpush2.bf16.msra.mxu0 %v1191
    %1299 = vmatprep.subr.bf16.mxu0 0
    %1300 = vmatpush2.bf16.msra.mxu0 %v1190
    %1301 = vmatprep.subr.bf16.mxu0 0
    %1302 = vmatpush2.bf16.msra.mxu0 %v1189
    %1303 = vmatprep.subr.bf16.mxu0 0
    %1304 = vmatpush2.bf16.msra.mxu0 %v1188
    %1305 = vmatprep.subr.bf16.mxu0 0
    %1306 = vmatpush2.bf16.msra.mxu0 %v1187
    %1307 = vmatprep.mubr.bf16.mxu0 %v971
    %1308 = vmatmul.mubr.bf16.gmra.mxu0 %v957
    %v1309 = vpop.f32.mrf.mxu0
    %v1310 = vadd.f32 %v932, %v1309
    %v1311 = vpop.f32.mrf.mxu0
    %v1312 = vpop.f32.mrf.mxu0
    %v1313 = vpop.f32.mrf.mxu0
    %1314 = vdwg.mxu0
    %1315 = vmatprep.subr.bf16.mxu0 0
    %1316 = vmatpush1.bf16.msra.mxu0 %v1202
    %1317 = vmatprep.subr.bf16.mxu0 0
    %1318 = vmatpush1.bf16.msra.mxu0 %v1201
    %1319 = vmatprep.subr.bf16.mxu0 0
    %1320 = vmatpush1.bf16.msra.mxu0 %v1200
    %1321 = vmatprep.subr.bf16.mxu0 0
    %1322 = vmatpush1.bf16.msra.mxu0 %v1199
    %1323 = vmatprep.subr.bf16.mxu0 0
    %1324 = vmatpush1.bf16.msra.mxu0 %v1198
    %1325 = vmatprep.subr.bf16.mxu0 0
    %1326 = vmatpush1.bf16.msra.mxu0 %v1197
    %1327 = vmatprep.subr.bf16.mxu0 0
    %1328 = vmatpush1.bf16.msra.mxu0 %v1196
    %1329 = vmatprep.subr.bf16.mxu0 0
    %1330 = vmatpush1.bf16.msra.mxu0 %v1195
    %1331 = vmatprep.subr.bf16.mxu0 0
    %1332 = vmatpush2.bf16.msra.mxu0 %v1210
    %1333 = vmatprep.subr.bf16.mxu0 0
    %1334 = vmatpush2.bf16.msra.mxu0 %v1209
    %1335 = vmatprep.subr.bf16.mxu0 0
    %1336 = vmatpush2.bf16.msra.mxu0 %v1208
    %1337 = vmatprep.subr.bf16.mxu0 0
    %1338 = vmatpush2.bf16.msra.mxu0 %v1207
    %1339 = vmatprep.subr.bf16.mxu0 0
    %1340 = vmatpush2.bf16.msra.mxu0 %v1206
    %1341 = vmatprep.subr.bf16.mxu0 0
    %1342 = vmatpush2.bf16.msra.mxu0 %v1205
    %1343 = vmatprep.subr.bf16.mxu0 0
    %1344 = vmatpush2.bf16.msra.mxu0 %v1204
    %1345 = vmatprep.subr.bf16.mxu0 0
    %1346 = vmatpush2.bf16.msra.mxu0 %v1203
    %1347 = vmatprep.mubr.bf16.mxu0 %v980
    %1348 = vmatmul.mubr.bf16.gmra.mxu0 %v979
    %v1349 = vpop.f32.mrf.mxu0
    %v1350 = vadd.f32 %v1310, %v1349
    %v1351 = vpop.f32.mrf.mxu0
    %v1352 = vpop.f32.mrf.mxu0
    %v1353 = vpop.f32.mrf.mxu0
    %1354 = vdwg.mxu0
    %1355 = vmatprep.subr.bf16.mxu0 0
    %1356 = vmatpush1.bf16.msra.mxu0 %v1218
    %1357 = vmatprep.subr.bf16.mxu0 0
    %1358 = vmatpush1.bf16.msra.mxu0 %v1217
    %1359 = vmatprep.subr.bf16.mxu0 0
    %1360 = vmatpush1.bf16.msra.mxu0 %v1216
    %1361 = vmatprep.subr.bf16.mxu0 0
    %1362 = vmatpush1.bf16.msra.mxu0 %v1215
    %1363 = vmatprep.subr.bf16.mxu0 0
    %1364 = vmatpush1.bf16.msra.mxu0 %v1214
    %1365 = vmatprep.subr.bf16.mxu0 0
    %1366 = vmatpush1.bf16.msra.mxu0 %v1213
    %1367 = vmatprep.subr.bf16.mxu0 0
    %1368 = vmatpush1.bf16.msra.mxu0 %v1212
    %1369 = vmatprep.subr.bf16.mxu0 0
    %1370 = vmatpush1.bf16.msra.mxu0 %v1211
    %1371 = vmatprep.subr.bf16.mxu0 0
    %1372 = vmatpush2.bf16.msra.mxu0 %v1226
    %1373 = vmatprep.subr.bf16.mxu0 0
    %1374 = vmatpush2.bf16.msra.mxu0 %v1225
    %1375 = vmatprep.subr.bf16.mxu0 0
    %1376 = vmatpush2.bf16.msra.mxu0 %v1224
    %1377 = vmatprep.subr.bf16.mxu0 0
    %1378 = vmatpush2.bf16.msra.mxu0 %v1223
    %1379 = vmatprep.subr.bf16.mxu0 0
    %1380 = vmatpush2.bf16.msra.mxu0 %v1222
    %1381 = vmatprep.subr.bf16.mxu0 0
    %1382 = vmatpush2.bf16.msra.mxu0 %v1221
    %1383 = vmatprep.subr.bf16.mxu0 0
    %1384 = vmatpush2.bf16.msra.mxu0 %v1220
    %1385 = vmatprep.subr.bf16.mxu0 0
    %1386 = vmatpush2.bf16.msra.mxu0 %v1219
    %1387 = vmatprep.mubr.bf16.mxu0 %v978
    %1388 = vmatmul.mubr.bf16.gmra.mxu0 %v964
    %v1389 = vpop.f32.mrf.mxu0
    %v1390 = vadd.f32 %v1350, %v1389
    %v1391 = vpop.f32.mrf.mxu0
    %v1392 = vpop.f32.mrf.mxu0
    %v1393 = vpop.f32.mrf.mxu0
    %1394 = vdwg.mxu0
    %v1395 = vlaneseq
    %v1396 = vshrl.u32 %v1395, 7
    %v1397 = vsub.s32 2, %v1396
    %v1398 = vrot.slane %v101, %v1397
    %v1399 = vmul.f32 %v827, %v1398
    %vm1400 = vcmask 1041408
    %v1401 = vsel %vm1400, %v1399, 0.0
    %1402 = vadd.xlane.f32.xlu0 %v1401
    %v1403 = vpop.xlane.xlu0 %1402
    %v1404 = vlaneseq
    %v1405 = vshrl.u32 %v1404, 7
    %v1406 = vsub.s32 5, %v1405
    %v1407 = vrot.slane %v101, %v1406
    %v1408 = vadd.f32 %v1403, %v1407
    %v1409 = vlaneseq
    %v1410 = vshrl.u32 %v1409, 7
    %v1411 = vsub.s32 3, %v1410
    %v1412 = vrot.slane %v101, %v1411
    %v1413 = vmul.f32 %v1390, %v1412
    %v1414 = vsel %vm1400, %v1413, 0.0
    %1415 = vadd.xlane.f32.xlu0 %v1414
    %v1416 = vpop.xlane.xlu0 %1415
    %v1417 = vadd.f32 %v1416, %v1407
    %1419 = vset.pattern.permute.xlu0 0
    %1420 = vperm.xlu0 %1419, %v1408
    %v1421 = vpop.permute.xlu0 %1420
    %v1423 = vmul.f32 %v1421, %v827
    %1425 = vset.pattern.permute.xlu0 1
    %1426 = vperm.xlu0 %1425, %v1417
    %v1427 = vpop.permute.xlu0 %1426
    %v1429 = vmul.f32 %v1427, %v1390
    %v1430 = vadd.f32 %v1423, %v1429
    %v1431 = vpack.c.bf16 %v1430, %v1430
    %v1432 = vld [vmem:[#allocation11] sm:$0xf]
    %v1433 = vld [vmem:[#allocation11 + $0x4] sm:$0xf]
    %v1434 = vld [vmem:[#allocation11 + $0x8] sm:$0xf]
    %v1435 = vld [vmem:[#allocation11 + $0xc] sm:$0xf]
    %v1436 = vld [vmem:[#allocation11 + $0x10] sm:$0xf]
    %v1437 = vld [vmem:[#allocation11 + $0x14] sm:$0xf]
    %v1438 = vld [vmem:[#allocation11 + $0x18] sm:$0xf]
    %v1439 = vld [vmem:[#allocation11 + $0x1c] sm:$0xf]
    %v1440 = vld [vmem:[#allocation11 + $0x20] sm:$0xf]
    %v1441 = vld [vmem:[#allocation11 + $0x24] sm:$0xf]
    %v1442 = vld [vmem:[#allocation11 + $0x28] sm:$0xf]
    %v1443 = vld [vmem:[#allocation11 + $0x2c] sm:$0xf]
    %v1444 = vld [vmem:[#allocation11 + $0x30] sm:$0xf]
    %v1445 = vld [vmem:[#allocation11 + $0x34] sm:$0xf]
    %v1446 = vld [vmem:[#allocation11 + $0x38] sm:$0xf]
    %v1447 = vld [vmem:[#allocation11 + $0x3c] sm:$0xf]
    %v1448 = vlaneseq
    %v1449 = vshrl.u32 %v1448, 7
    %v1450 = vsub.s32 4, %v1449
    %v1451 = vrot.slane %v101, %v1450
    %v1468 = vunpack.c.l.b16 %v1432
    %v1469 = vunpack.c.l.b16 %v1433
    %v1470 = vunpack.c.l.b16 %v1434
    %v1471 = vunpack.c.l.b16 %v1435
    %v1472 = vunpack.c.l.b16 %v1436
    %v1473 = vunpack.c.l.b16 %v1437
    %v1474 = vunpack.c.l.b16 %v1438
    %v1475 = vunpack.c.l.b16 %v1439
    %v1476 = vunpack.c.l.b16 %v1440
    %v1477 = vunpack.c.l.b16 %v1441
    %v1478 = vunpack.c.l.b16 %v1442
    %v1479 = vunpack.c.l.b16 %v1443
    %v1480 = vunpack.c.l.b16 %v1444
    %v1481 = vunpack.c.l.b16 %v1445
    %v1482 = vunpack.c.l.b16 %v1446
    %v1483 = vunpack.c.l.b16 %v1447
    %v1484 = vpack.c.b16 %v1469, %v1468
    %v1485 = vpack.c.b16 %v1471, %v1470
    %v1486 = vpack.c.b16 %v1473, %v1472
    %v1487 = vpack.c.b16 %v1475, %v1474
    %v1488 = vpack.c.b16 %v1477, %v1476
    %v1489 = vpack.c.b16 %v1479, %v1478
    %v1490 = vpack.c.b16 %v1481, %v1480
    %v1491 = vpack.c.b16 %v1483, %v1482
    %1500 = vmatprep.subr.bf16.mxu0 0
    %1501 = vmatpush1.bf16.msra.mxu0 %v1491
    %1502 = vmatprep.subr.bf16.mxu0 0
    %1503 = vmatpush1.bf16.msra.mxu0 %v1490
    %1504 = vmatprep.subr.bf16.mxu0 0
    %1505 = vmatpush1.bf16.msra.mxu0 %v1489
    %1506 = vmatprep.subr.bf16.mxu0 0
    %1507 = vmatpush1.bf16.msra.mxu0 %v1488
    %1508 = vmatprep.subr.bf16.mxu0 0
    %1509 = vmatpush1.bf16.msra.mxu0 %v1487
    %1510 = vmatprep.subr.bf16.mxu0 0
    %1511 = vmatpush1.bf16.msra.mxu0 %v1486
    %1512 = vmatprep.subr.bf16.mxu0 0
    %1513 = vmatpush1.bf16.msra.mxu0 %v1485
    %1514 = vmatprep.subr.bf16.mxu0 0
    %1515 = vmatpush1.bf16.msra.mxu0 %v1484
    %1516 = vmatprep.subr.bf16.mxu0 0
    %1517 = vmatpush2.bf16.msra.mxu0 0
    %1518 = vmatprep.subr.bf16.mxu0 0
    %1519 = vmatpush2.bf16.msra.mxu0 0
    %1520 = vmatprep.subr.bf16.mxu0 0
    %1521 = vmatpush2.bf16.msra.mxu0 0
    %1522 = vmatprep.subr.bf16.mxu0 0
    %1523 = vmatpush2.bf16.msra.mxu0 0
    %1524 = vmatprep.subr.bf16.mxu0 0
    %1525 = vmatpush2.bf16.msra.mxu0 0
    %1526 = vmatprep.subr.bf16.mxu0 0
    %1527 = vmatpush2.bf16.msra.mxu0 0
    %1528 = vmatprep.subr.bf16.mxu0 0
    %1529 = vmatpush2.bf16.msra.mxu0 0
    %1530 = vmatprep.subr.bf16.mxu0 0
    %1531 = vmatpush2.bf16.msra.mxu0 0
    %1532 = vmatprep.mubr.bf16.mxu0 0
    %1533 = vmatmul.mubr.bf16.gmra.mxu0 %v1431
    %v1534 = vpop.f32.mrf.mxu0
    %v1535 = vadd.f32 %v1451, %v1534
    %v1536 = vpop.f32.mrf.mxu0
    %v1537 = vpop.f32.mrf.mxu0
    %v1538 = vpop.f32.mrf.mxu0
    %1539 = vdwg.mxu0
    %v1540 = vpack.c.bf16 %v1535, %v1535
    %1541 = vst [vmem:[#allocation13] sm:$0x1] %v1540
    // Predicated region
    $region50: #{tpu_custom_call.1} parent=1 // pred_check
      _
    $region51: #{tpu_custom_call.1} parent=1 // pred_check_branch
      %1543 = sbr.rel (0) target = $region53
    $region52: #{tpu_custom_call.1} parent=1 // pred_region
      %s1545 = ssub.s32 16, 16
      %1546 = vsyncadd [#allocation4], %s1545
      %s1548 = sshll.u32 [#allocation13], 4
      %s1549 = int_to_ptr.vmem [resolvable:$true] %s1548
      %1551 = dma.vmem_to_hbm [thread:$0]  %s1549, 16, %s6, [#allocation4]
    $region53: #{tpu_custom_call.1} parent=1 // pred_fallthru
      _
    // Predicated region
    $region54: #{tpu_custom_call.1} parent=1 // pred_check
      _
    $region55: #{tpu_custom_call.1} parent=1 // pred_check_branch
      %1553 = sbr.rel (0) target = $region57
    $region56: #{tpu_custom_call.1} parent=1 // pred_region
      %1554 = dma.done [#allocation4], 16
    $region57: #{tpu_custom_call.1} parent=1 // pred_fallthru
      _
    %1555 = vsyncpa [#allocation3], 1
    %1556 = vsyncpa [#allocation6], 1
    %1557 = vsyncpa [#allocation9], 1
    %1558 = vsyncpa [#allocation12], 1
    %1559 = vsyncpa [#allocation4], 1

</llo_original>
